<compile_context>
chip_gen: v7x
topology: tpu7x:2x2x1
jax: 0.10.0
libtpu: 0.0.40
codegen_flags: <defaults>
</compile_context>

<pallas_src>
import jax
import jax.numpy as jnp
from jax import lax
from jax.experimental import pallas as pl
from jax.experimental.pallas import tpu as pltpu


def _round_up(n, m):
    return (n + m - 1) // m * m


# ---------------------------------------------------------------------------
# Kernel body (shared by both paths)
# ---------------------------------------------------------------------------
def _linear_kernel(x_ref, wt_ref, b_ref, o_ref):
    # x_ref: (tm, IN)   wt_ref: (IN, OUT)   b_ref: (1, OUT)   o_ref: (tm, OUT)
    acc = lax.dot_general(
        x_ref[...], wt_ref[...],
        dimension_numbers=(((1,), (0,)), ((), ())),   # native (M,K)x(K,N)
        preferred_element_type=jnp.float32,
    )
    o_ref[...] = (acc + b_ref[...]).astype(o_ref.dtype)


def _cost(B, IN, OUT, in_itemsize):
    return pl.CostEstimate(
        flops=2 * B * IN * OUT,
        transcendentals=0,
        bytes_accessed=in_itemsize * (B * IN + IN * OUT) + 4 * (OUT + B * OUT),
    )


# ---------------------------------------------------------------------------
# Dispatch helpers
# ---------------------------------------------------------------------------
def _single_block_bytes(B, IN, OUT, itemsize):
    """Padded VMEM footprint of the grid-less path ((8,128) tile padding)."""
    rows = _round_up(max(B, 8), 8)
    x_bytes = rows * _round_up(IN, 128) * itemsize
    o_bytes = rows * _round_up(OUT, 128) * 4
    w_bytes = _round_up(IN, 8) * _round_up(OUT, 128) * itemsize
    b_bytes = 8 * _round_up(OUT, 128) * 4
    return x_bytes + o_bytes + w_bytes + b_bytes


def _vmem_budget_bytes():
    """How much VMEM the grid-less path may use before we switch to tiling."""
    try:
        cap = int(pltpu.get_tpu_info().vmem_capacity_bytes)
        return max(cap // 32, 1 << 20)      # ~2 MiB on v7x, ~4 MiB on v5e/v6e
    except Exception:
        return 2 << 20                       # conservative, safe on all gens


def _pick_tm(B):
    """Big tiles amortize per-grid-step overhead; keep >=4 steps for the
    'parallel' batch axis so v7x's two TensorCores both get work."""
    tm = 2048
    while tm > 256 and pl.cdiv(B, tm) < 4:
        tm //= 2
    return tm


def _x_block_spec(tm, IN):
    # Triple-buffer the streamed activations when pipeline_mode is available.
    try:
        return pl.BlockSpec((tm, IN), lambda i: (i, 0),
                            pipeline_mode=pl.Buffered(3))
    except (TypeError, AttributeError):
        return pl.BlockSpec((tm, IN), lambda i: (i, 0))


# ---------------------------------------------------------------------------
# The two execution paths
# ---------------------------------------------------------------------------
def _linear_forward_single(x, w_t, b2, out_dtype):
    """Grid-less single-block call: small batches (pure-overhead regime)."""
    B, IN = x.shape
    OUT = w_t.shape[1]
    footprint = _single_block_bytes(B, IN, OUT, x.dtype.itemsize)
    return pl.pallas_call(
        _linear_kernel,
        out_shape=jax.ShapeDtypeStruct((B, OUT), out_dtype),
        in_specs=[
            pl.BlockSpec(memory_space=pltpu.MemorySpace.VMEM),
            pl.BlockSpec(memory_space=pltpu.MemorySpace.VMEM),
            pl.BlockSpec(memory_space=pltpu.MemorySpace.VMEM),
        ],
        out_specs=pl.BlockSpec(memory_space=pltpu.MemorySpace.VMEM),
        compiler_params=pltpu.CompilerParams(
            # sized to the actual padded blocks (+ headroom), so the path is
            # safe even under v5e's 16 MiB scoped-VMEM default.
            vmem_limit_bytes=int(min(max(4 * footprint, 4 << 20), 64 << 20)),
        ),
        cost_estimate=_cost(B, IN, OUT, x.dtype.itemsize),
    )(x, w_t, b2)


def _linear_forward_tiled(x, w_t, b2, out_dtype, tm):
    """Batch-tiled, pipelined call for large B: weight/bias stay resident in
    VMEM, only activations stream; batch axis is 'parallel' (2 TCs on v7x).
    grid uses cdiv, so any batch size (ragged included) is handled."""
    B, IN = x.shape
    OUT = w_t.shape[1]
    return pl.pallas_call(
        _linear_kernel,
        out_shape=jax.ShapeDtypeStruct((B, OUT), out_dtype),
        grid=(pl.cdiv(B, tm),),
        in_specs=[
            _x_block_spec(tm, IN),                       # streamed activations
            pl.BlockSpec((IN, OUT), lambda i: (0, 0)),   # weight resident
            pl.BlockSpec((1, OUT), lambda i: (0, 0)),    # bias resident
        ],
        out_specs=pl.BlockSpec((tm, OUT), lambda i: (i, 0)),
        compiler_params=pltpu.CompilerParams(
            dimension_semantics=("parallel",),
        ),
        cost_estimate=_cost(B, IN, OUT, x.dtype.itemsize),
    )(x, w_t, b2)


# ---------------------------------------------------------------------------
# Public wrapper (torch.nn.Linear semantics)
# ---------------------------------------------------------------------------
def linear_forward(x, weight, bias, *, compute_dtype=None):
    """y = x @ weight.T + bias.

    x:      (B, in_features)
    weight: (out_features, in_features)   (PyTorch layout, NOT transposed)
    bias:   (out_features,)
    compute_dtype: optionally cast x / weight (e.g. jnp.bfloat16) to halve the
        dominant activation HBM traffic; accumulation is f32 and the output
        keeps x's original dtype.
    """
    B, IN = x.shape
    OUT, IN_w = weight.shape
    assert IN == IN_w

    out_dtype = x.dtype
    # One-time tiny transpose (2 KB) hoisted here so the MXU sees a clean
    # (K, N) RHS with OUT on lanes every grid step.
    w_t = weight.T
    b2 = bias.reshape(1, OUT).astype(jnp.float32)

    if compute_dtype is not None:
        x = x.astype(compute_dtype)
        w_t = w_t.astype(compute_dtype)

    # Bytes-based dispatch, portable across v5e / v6e / v7x.
    if _single_block_bytes(B, IN, OUT, x.dtype.itemsize) <= _vmem_budget_bytes():
        # NOTE: at the module's nominal B=8 this is pure custom-call dispatch
        # overhead; fusing this linear with adjacent ops (or letting XLA fuse
        # a plain jnp.dot) would win, but a Pallas kernel is what's asked for.
        return _linear_forward_single(x, w_t, b2, out_dtype)
    return _linear_forward_tiled(x, w_t, b2, out_dtype, _pick_tm(B))


if __name__ == "__main__":
    num_class = 10
    in_features = 50
    batch = 8

    key = jax.random.PRNGKey(0)
    kx, kw, kb, kx2 = jax.random.split(key, 4)

    # Deterministic synthetic parameters (PyTorch layout: weight (out, in)).
    bound = 1.0 / jnp.sqrt(jnp.float32(in_features))
    weight = jax.random.uniform(
        kw, (num_class, in_features), jnp.float32, -bound, bound
    )
    bias = jax.random.uniform(kb, (num_class,), jnp.float32, -bound, bound)

    # --- nominal small-batch case (grid-less path) --------------------------
    x = jax.random.normal(kx, (batch, in_features), jnp.float32)
    y = jax.block_until_ready(linear_forward(x, weight, bias))
    y_ref = x @ weight.T + bias
    assert y.shape == (batch, num_class)
    assert jnp.allclose(y, y_ref, atol=1e-5, rtol=1e-5)

    # --- large ragged batch (tiled path: cdiv grid, partial last block) -----
    big_batch = 2500  # not a multiple of the tile -> exercises the cdiv grid
    xl = jax.random.normal(kx2, (big_batch, in_features), jnp.float32)
    yl = jax.block_until_ready(linear_forward(xl, weight, bias))
    yl_ref = xl @ weight.T + bias
    assert yl.shape == (big_batch, num_class)
    assert jnp.allclose(yl, yl_ref, atol=1e-4, rtol=1e-4)

    print("KERNEL_OK")
</pallas_src>

<mosaic_0001>
module attributes {stable_mosaic.version = 11 : i64} {
  func.func @_linear_kernel(%arg0: memref<8x50xf32, #tpu.memory_space<vmem>>, %arg1: memref<50x10xf32, #tpu.memory_space<vmem>>, %arg2: memref<1x10xf32, #tpu.memory_space<vmem>>, %arg3: memref<8x10xf32, #tpu.memory_space<vmem>>) attributes {dimension_semantics = [], scalar_prefetch = 0 : i64, scratch_operands = 0 : i64, tpu.core_type = #tpu.core_type<tc>} {
    %c0 = arith.constant 0 : index
    %c0_0 = arith.constant 0 : index
    %0 = vector.load %arg0[%c0, %c0_0] : memref<8x50xf32, #tpu.memory_space<vmem>>, vector<8x50xf32>
    %c0_1 = arith.constant 0 : index
    %c0_2 = arith.constant 0 : index
    %1 = vector.load %arg1[%c0_1, %c0_2] : memref<50x10xf32, #tpu.memory_space<vmem>>, vector<50x10xf32>
    %cst = arith.constant dense<0.000000e+00> : vector<8x10xf32>
    %2 = tpu.matmul %0, %1, %cst {dimension_numbers = #tpu.dot_dimension_numbers<[1], [0], [0], [1], [0, 0, 1, 1], [], []>} : vector<8x50xf32>, vector<50x10xf32>, vector<8x10xf32> -> vector<8x10xf32>
    %c0_3 = arith.constant 0 : index
    %c0_4 = arith.constant 0 : index
    %3 = vector.load %arg2[%c0_3, %c0_4] : memref<1x10xf32, #tpu.memory_space<vmem>>, vector<1x10xf32>
    %4 = vector.broadcast %3 : vector<1x10xf32> to vector<8x10xf32>
    %5 = arith.addf %2, %4 : vector<8x10xf32>
    %c0_5 = arith.constant 0 : index
    %c0_6 = arith.constant 0 : index
    %6 = vector.load %arg3[%c0_5, %c0_6] : memref<8x10xf32, #tpu.memory_space<vmem>>, vector<8x10xf32>
    tpu.vector_store %arg3[%c0_5, %c0_6], %5 {strides = array<i32>} : memref<8x10xf32, #tpu.memory_space<vmem>>, vector<8x10xf32>,
    return
  }
}

</mosaic_0001>

<llo_original>
// kernel: tpu_custom_call.1
$region0: #{tpu_custom_call.1}
  #allocation0 [shape = 'u32[]', space=smem, size = 0x4, offset = 0x4, fixed_abs, tag = 'smem constant byte address 0x4 - core index']
  #allocation1 [shape = 'u32[144,128]{1,0:T(1,128)}', space=vmem, size = 0x12000, scoped, tag = 'internal scratch']
  %s0 = inlined_call_operand.vmem [shape: f32[8,50], index: 0, kind: input, shape index: {}]
  %s1 = inlined_call_operand.vmem [shape: f32[50,10], index: 1, kind: input, shape index: {}]
  %s2 = inlined_call_operand.vmem [shape: f32[1,10], index: 2, kind: input, shape index: {}]
  %s3 = inlined_call_operand.hbm [shape: f32[8,10], index: 3, kind: output, shape index: {}]
  %s4 = sld [smem:[#allocation0]]
  $region22: #{tpu_custom_call.1} parent=0
    _
  %s6 = ssub.s32 1, %s4
  %s7 = scalar_select 0, %s6, %s4
  $region1: #{tpu_custom_call.1} parent=0
    #allocation2 [shape = 'u8[4096]{0}', space=vmem, size = 0x1000, scoped, tag = 'output window, operand 0, single buffered']
    #allocation3 [shape = 's32[1]{0}', space=sflag, size = 0x4, scoped, tag = 'scoped memory for tpu_custom_call.1']
    %8 = vsyncpa [#allocation3], 0
    // Predicated region
    $region2: #{tpu_custom_call.1} parent=1 // pred_check
      _
    $region3: #{tpu_custom_call.1} parent=1 // pred_check_branch
      %10 = sbr.rel (0) target = $region5
    $region4: #{tpu_custom_call.1} parent=1 // pred_region
      _
    $region5: #{tpu_custom_call.1} parent=1 // pred_fallthru
      _
    // Predicated region
    $region6: #{tpu_custom_call.1} parent=1 // pred_check
      _
    $region7: #{tpu_custom_call.1} parent=1 // pred_check_branch
      %12 = sbr.rel (0) target = $region9
    $region8: #{tpu_custom_call.1} parent=1 // pred_region
      _
    $region9: #{tpu_custom_call.1} parent=1 // pred_fallthru
      _
    // Predicated region
    $region10: #{tpu_custom_call.1} parent=1 // pred_check
      _
    $region11: #{tpu_custom_call.1} parent=1 // pred_check_branch
      %14 = sbr.rel (0) target = $region13
    $region12: #{tpu_custom_call.1} parent=1 // pred_region
      _
    $region13: #{tpu_custom_call.1} parent=1 // pred_fallthru
      _
    %v15 = vld [vmem:[%s0] sm:$0xff]
    %v16 = vld [vmem:[%s1] sm:$0xff]
    %v17 = vld [vmem:[%s1 + $0x8] sm:$0xff]
    %v18 = vld [vmem:[%s1 + $0x10] sm:$0xff]
    %v19 = vld [vmem:[%s1 + $0x18] sm:$0xff]
    %v20 = vld [vmem:[%s1 + $0x20] sm:$0xff]
    %v21 = vld [vmem:[%s1 + $0x28] sm:$0xff]
    %v22 = vld [vmem:[%s1 + $0x30] sm:$0x3]
    %v23 = vld [vmem:[%s2] sm:$0x1]
    %v25 = vlaneseq
    %v26 = vshrl.u32 %v25, 7
    %v27 = vsub.s32 0, %v26
    %v28 = vrot.slane %v23, %v27
    %vm30 = vcmask 408576
    %v32 = vsel %vm30, %v15, 0
    %vm34 = vcmask 1041408
    %v36 = vsel %vm34, %v22, 0
    %38 = vmatprep.subr.mxu0 0.0
    %39 = vmatpush1.msra.mxu0 %v16
    %40 = vmatprep.subr.mxu0 0.0
    %41 = vmatpush1.msra.mxu0 %v17
    %42 = vmatprep.subr.mxu0 0.0
    %43 = vmatpush1.msra.mxu0 %v18
    %44 = vmatprep.subr.mxu0 0.0
    %45 = vmatpush1.msra.mxu0 %v19
    %46 = vmatprep.subr.mxu0 0.0
    %47 = vmatpush1.msra.mxu0 %v20
    %48 = vmatprep.subr.mxu0 0.0
    %49 = vmatpush1.msra.mxu0 %v21
    %50 = vmatprep.subr.mxu0 0.0
    %51 = vmatpush1.msra.mxu0 %v36
    %52 = vmatprep.subr.mxu0 0.0
    %53 = vmatpush1.msra.mxu0 0.0
    %54 = vmatprep.subr.mxu0 0.0
    %55 = vmatpush1.msra.mxu0 0.0
    %56 = vmatprep.subr.mxu0 0.0
    %57 = vmatpush1.msra.mxu0 0.0
    %58 = vmatprep.subr.mxu0 0.0
    %59 = vmatpush1.msra.mxu0 0.0
    %60 = vmatprep.subr.mxu0 0.0
    %61 = vmatpush1.msra.mxu0 0.0
    %62 = vmatprep.subr.mxu0 0.0
    %63 = vmatpush1.msra.mxu0 0.0
    %64 = vmatprep.subr.mxu0 0.0
    %65 = vmatpush1.msra.mxu0 0.0
    %66 = vmatprep.subr.mxu0 0.0
    %67 = vmatpush1.msra.mxu0 0.0
    %68 = vmatprep.subr.mxu0 0.0
    %69 = vmatpush1.msra.mxu0 0.0
    %70 = vmatprep.subr.mxu0 0.0
    %71 = vmatpush1.msra.mxu0 0.0
    %72 = vmatprep.subr.mxu0 0.0
    %73 = vmatpush1.msra.mxu0 0.0
    %74 = vmatprep.subr.mxu0 0.0
    %75 = vmatpush1.msra.mxu0 0.0
    %76 = vmatprep.subr.mxu0 0.0
    %77 = vmatpush1.msra.mxu0 0.0
    %78 = vmatprep.subr.mxu0 0.0
    %79 = vmatpush1.msra.mxu0 0.0
    %80 = vmatprep.subr.mxu0 0.0
    %81 = vmatpush1.msra.mxu0 0.0
    %82 = vmatprep.subr.mxu0 0.0
    %83 = vmatpush1.msra.mxu0 0.0
    %84 = vmatprep.subr.mxu0 0.0
    %85 = vmatpush1.msra.mxu0 0.0
    %86 = vmatprep.subr.mxu0 0.0
    %87 = vmatpush1.msra.mxu0 0.0
    %88 = vmatprep.subr.mxu0 0.0
    %89 = vmatpush1.msra.mxu0 0.0
    %90 = vmatprep.subr.mxu0 0.0
    %91 = vmatpush1.msra.mxu0 0.0
    %92 = vmatprep.subr.mxu0 0.0
    %93 = vmatpush1.msra.mxu0 0.0
    %94 = vmatprep.subr.mxu0 0.0
    %95 = vmatpush1.msra.mxu0 0.0
    %96 = vmatprep.subr.mxu0 0.0
    %97 = vmatpush1.msra.mxu0 0.0
    %98 = vmatprep.subr.mxu0 0.0
    %99 = vmatpush1.msra.mxu0 0.0
    %100 = vmatprep.subr.mxu0 0.0
    %101 = vmatpush1.msra.mxu0 0.0
    %102 = vmatprep.mubr.f32.mxu0 0.0
    %103 = vmatmul.mubr.f32.gmra.mrb[0].mxu0 %v32
    %v104 = vpop.f32.mrb[0].mxu0
    %v105 = vadd.f32 %v28, %v104
    %v106 = vpop.f32.mrb[0].mxu0
    %107 = vdwg.mxu0
    %vm108 = vcmask 80896
    %109 = vst.msk [vmem:[#allocation2] sm:$0xff] %vm108, %v105
    // Predicated region
    $region14: #{tpu_custom_call.1} parent=1 // pred_check
      _
    $region15: #{tpu_custom_call.1} parent=1 // pred_check_branch
      %111 = sbr.rel (0) target = $region17
    $region16: #{tpu_custom_call.1} parent=1 // pred_region
      %s113 = ssub.s32 128, 128
      %114 = vsyncadd [#allocation3], %s113
      %s116 = sshll.u32 [#allocation2], 4
      %s117 = int_to_ptr.vmem [resolvable:$true] %s116
      %119 = dma.vmem_to_hbm [thread:$0]  %s117, 128, %s3, [#allocation3]
    $region17: #{tpu_custom_call.1} parent=1 // pred_fallthru
      _
    // Predicated region
    $region18: #{tpu_custom_call.1} parent=1 // pred_check
      _
    $region19: #{tpu_custom_call.1} parent=1 // pred_check_branch
      %121 = sbr.rel (0) target = $region21
    $region20: #{tpu_custom_call.1} parent=1 // pred_region
      %122 = dma.done [#allocation3], 128
    $region21: #{tpu_custom_call.1} parent=1 // pred_fallthru
      _
    %123 = vsyncpa [#allocation3], 1

</llo_original>
